<compile_context>
chip_gen: v6e
topology: v6e:2x2x1
jax: 0.10.0
libtpu: 0.0.40
codegen_flags: <defaults>
</compile_context>

<pallas_src>
import jax
import jax.numpy as jnp
from jax.experimental import pallas as pl
from jax.experimental.pallas import tpu as pltpu

IN_FEATURES = 20
HIDDEN = 256
OUT_FEATURES = 10


def mlp_kernel(x_ref, w1_ref, b1_ref, w2_ref, b2_ref, o_ref):
    # Hidden layer: (TB, 20) @ (20, 256), f32 MXU path with f32 accumulate.
    h = jnp.dot(x_ref[...], w1_ref[...], preferred_element_type=jnp.float32)
    h = jnp.maximum(h + b1_ref[...], 0.0)  # bias broadcast over batch + ReLU
    # Output layer: (TB, 256) @ (256, 10), f32 accumulate. Narrow (10-lane) store.
    out = jnp.dot(h, w2_ref[...], preferred_element_type=jnp.float32)
    o_ref[...] = (out + b2_ref[...]).astype(o_ref.dtype)


def _choose_batch_tile(B, tb):
    """Pick (TB, num_tiles) s.t. padding < 16 rows and, for large B, >= 2 tiles (v7x)."""
    num_tiles = pl.cdiv(B, tb)
    if num_tiles == 1 and B >= 256:
        num_tiles = 2  # give both v7x TensorCores real, balanced work
    TB = ((pl.cdiv(B, num_tiles) + 15) // 16) * 16
    return TB, num_tiles


def mlp_forward(x, w1, b1, w2, b2, *, tb=2048):
    """x:(B,20) f32, w1:(20,256), b1:(1,256), w2:(256,10), b2:(1,10). Returns (B,10) f32."""
    B, K = x.shape
    H = w1.shape[1]
    N = w2.shape[1]

    b1f = b1.reshape(1, H).astype(jnp.float32)
    b2f = b2.reshape(1, N).astype(jnp.float32)
    w1f = w1.astype(jnp.float32)
    w2f = w2.astype(jnp.float32)

    TB, num_tiles = _choose_batch_tile(B, tb)
    B_pad = TB * num_tiles
    if B_pad == B:
        xb = x
    else:
        xb = jnp.zeros((B_pad, K), x.dtype).at[:B, :].set(x)

    out = pl.pallas_call(
        mlp_kernel,
        out_shape=jax.ShapeDtypeStruct((B_pad, N), jnp.float32),
        grid=(num_tiles,),
        in_specs=[
            pl.BlockSpec((TB, K), lambda i: (i, 0)),    # X tile streams over batch
            pl.BlockSpec((K, H), lambda i: (0, 0)),     # W1 resident in VMEM
            pl.BlockSpec((1, H), lambda i: (0, 0)),     # b1 resident
            pl.BlockSpec((H, N), lambda i: (0, 0)),     # W2 resident
            pl.BlockSpec((1, N), lambda i: (0, 0)),     # b2 resident
        ],
        out_specs=pl.BlockSpec((TB, N), lambda i: (i, 0)),  # narrow (10-wide) writeback
        compiler_params=pltpu.CompilerParams(
            dimension_semantics=("parallel",),  # v7x: shard batch tiles across 2 TCs
        ),
    )(xb, w1f, b1f, w2f, b2f)

    return out if B_pad == B else out[:B, :]


def init_params(key):
    """Deterministic init matching PyTorch nn.Linear default:
    U(-1/sqrt(fan_in), 1/sqrt(fan_in)) for both weight and bias."""
    k1, k2, k3, k4 = jax.random.split(key, 4)
    bound1 = 1.0 / jnp.sqrt(IN_FEATURES)
    bound2 = 1.0 / jnp.sqrt(HIDDEN)
    w1 = jax.random.uniform(k1, (IN_FEATURES, HIDDEN), jnp.float32, -bound1, bound1)
    b1 = jax.random.uniform(k2, (1, HIDDEN), jnp.float32, -bound1, bound1)
    w2 = jax.random.uniform(k3, (HIDDEN, OUT_FEATURES), jnp.float32, -bound2, bound2)
    b2 = jax.random.uniform(k4, (1, OUT_FEATURES), jnp.float32, -bound2, bound2)
    return w1, b1, w2, b2


def _reference_f32(x, w1, b1, w2, b2):
    h = jnp.maximum(x @ w1 + b1, 0.0)
    return h @ w2 + b2


if __name__ == "__main__":
    key = jax.random.PRNGKey(0)
    kx, kp, kx2 = jax.random.split(key, 3)

    w1, b1, w2, b2 = init_params(kp)

    # Small batch (single tile, padded batch rows).
    batch = 8
    x = jax.random.normal(kx, (batch, IN_FEATURES), jnp.float32)
    out = jax.block_until_ready(mlp_forward(x, w1, b1, w2, b2))
    assert out.shape == (batch, OUT_FEATURES)
    ref = _reference_f32(x, w1, b1, w2, b2)
    # Loose-ish tolerance: both sides run matmuls on the MXU (pass decomposition may differ).
    assert jnp.allclose(out, ref, atol=2e-2, rtol=2e-2)

    # Ragged batch exercising the multi-tile grid + minimal (<16 rows) padding path.
    batch2 = 600
    x2 = jax.random.normal(kx2, (batch2, IN_FEATURES), jnp.float32)
    out2 = jax.block_until_ready(mlp_forward(x2, w1, b1, w2, b2))
    assert out2.shape == (batch2, OUT_FEATURES)
    assert jnp.allclose(out2, _reference_f32(x2, w1, b1, w2, b2), atol=2e-2, rtol=2e-2)

    print("KERNEL_OK")
</pallas_src>

<mosaic_0001>
module attributes {stable_mosaic.version = 11 : i64} {
  func.func @mlp_kernel(%arg0: i32, %arg1: memref<16x20xf32, #tpu.memory_space<vmem>>, %arg2: memref<20x256xf32, #tpu.memory_space<vmem>>, %arg3: memref<1x256xf32, #tpu.memory_space<vmem>>, %arg4: memref<256x10xf32, #tpu.memory_space<vmem>>, %arg5: memref<1x10xf32, #tpu.memory_space<vmem>>, %arg6: memref<16x10xf32, #tpu.memory_space<vmem>>) attributes {dimension_semantics = [#tpu.dimension_semantics<parallel>], iteration_bounds = array<i64: 1>, scalar_prefetch = 0 : i64, scratch_operands = 0 : i64, tpu.core_type = #tpu.core_type<tc>, window_params = [{transform_indices = @transform_0, window_bounds = array<i64: 16, 20>}, {pipeline_mode = #tpu.pipeline_mode<synchronous>, transform_indices = @transform_1, window_bounds = array<i64: 20, 256>}, {pipeline_mode = #tpu.pipeline_mode<synchronous>, transform_indices = @transform_2, window_bounds = array<i64: 1, 256>}, {pipeline_mode = #tpu.pipeline_mode<synchronous>, transform_indices = @transform_3, window_bounds = array<i64: 256, 10>}, {pipeline_mode = #tpu.pipeline_mode<synchronous>, transform_indices = @transform_4, window_bounds = array<i64: 1, 10>}, {transform_indices = @transform_5, window_bounds = array<i64: 16, 10>}]} {
    %c0 = arith.constant 0 : index
    %c0_0 = arith.constant 0 : index
    %0 = vector.load %arg1[%c0, %c0_0] : memref<16x20xf32, #tpu.memory_space<vmem>>, vector<16x20xf32>
    %c0_1 = arith.constant 0 : index
    %c0_2 = arith.constant 0 : index
    %1 = vector.load %arg2[%c0_1, %c0_2] : memref<20x256xf32, #tpu.memory_space<vmem>>, vector<20x256xf32>
    %cst = arith.constant dense<0.000000e+00> : vector<16x256xf32>
    %2 = tpu.matmul %0, %1, %cst {dimension_numbers = #tpu.dot_dimension_numbers<[1], [0], [0], [1], [0, 0, 1, 1], [], []>} : vector<16x20xf32>, vector<20x256xf32>, vector<16x256xf32> -> vector<16x256xf32>
    %c0_3 = arith.constant 0 : index
    %c0_4 = arith.constant 0 : index
    %3 = vector.load %arg3[%c0_3, %c0_4] : memref<1x256xf32, #tpu.memory_space<vmem>>, vector<1x256xf32>
    %4 = vector.broadcast %3 : vector<1x256xf32> to vector<16x256xf32>
    %5 = arith.addf %2, %4 : vector<16x256xf32>
    %cst_5 = arith.constant 0.000000e+00 : f32
    %6 = vector.broadcast %cst_5 : f32 to vector<16x256xf32>
    %7 = arith.maximumf %5, %6 : vector<16x256xf32>
    %c0_6 = arith.constant 0 : index
    %c0_7 = arith.constant 0 : index
    %8 = vector.load %arg4[%c0_6, %c0_7] : memref<256x10xf32, #tpu.memory_space<vmem>>, vector<256x10xf32>
    %cst_8 = arith.constant dense<0.000000e+00> : vector<16x10xf32>
    %9 = tpu.matmul %7, %8, %cst_8 {dimension_numbers = #tpu.dot_dimension_numbers<[1], [0], [0], [1], [0, 0, 1, 1], [], []>} : vector<16x256xf32>, vector<256x10xf32>, vector<16x10xf32> -> vector<16x10xf32>
    %c0_9 = arith.constant 0 : index
    %c0_10 = arith.constant 0 : index
    %10 = vector.load %arg5[%c0_9, %c0_10] : memref<1x10xf32, #tpu.memory_space<vmem>>, vector<1x10xf32>
    %11 = vector.broadcast %10 : vector<1x10xf32> to vector<16x10xf32>
    %12 = arith.addf %9, %11 : vector<16x10xf32>
    %c0_11 = arith.constant 0 : index
    %c0_12 = arith.constant 0 : index
    %13 = vector.load %arg6[%c0_11, %c0_12] : memref<16x10xf32, #tpu.memory_space<vmem>>, vector<16x10xf32>
    tpu.vector_store %arg6[%c0_11, %c0_12], %12 {strides = array<i32>} : memref<16x10xf32, #tpu.memory_space<vmem>>, vector<16x10xf32>,
    return
  }
  func.func @transform_0(%arg0: i32) -> (i32, i32) {
    %c0_i32 = arith.constant 0 : i32
    %c0_i32_0 = arith.constant 0 : i32
    return %arg0, %c0_i32 : i32, i32
  }
  func.func @transform_1(%arg0: i32) -> (i32, i32) {
    %c0_i32 = arith.constant 0 : i32
    %c0_i32_0 = arith.constant 0 : i32
    %c0_i32_1 = arith.constant 0 : i32
    return %c0_i32, %c0_i32_0 : i32, i32
  }
  func.func @transform_2(%arg0: i32) -> (i32, i32) {
    %c0_i32 = arith.constant 0 : i32
    %c0_i32_0 = arith.constant 0 : i32
    %c0_i32_1 = arith.constant 0 : i32
    return %c0_i32, %c0_i32_0 : i32, i32
  }
  func.func @transform_3(%arg0: i32) -> (i32, i32) {
    %c0_i32 = arith.constant 0 : i32
    %c0_i32_0 = arith.constant 0 : i32
    %c0_i32_1 = arith.constant 0 : i32
    return %c0_i32, %c0_i32_0 : i32, i32
  }
  func.func @transform_4(%arg0: i32) -> (i32, i32) {
    %c0_i32 = arith.constant 0 : i32
    %c0_i32_0 = arith.constant 0 : i32
    %c0_i32_1 = arith.constant 0 : i32
    return %c0_i32, %c0_i32_0 : i32, i32
  }
  func.func @transform_5(%arg0: i32) -> (i32, i32) {
    %c0_i32 = arith.constant 0 : i32
    %c0_i32_0 = arith.constant 0 : i32
    return %arg0, %c0_i32 : i32, i32
  }
}

</mosaic_0001>

<llo_original>
// kernel: tpu_custom_call.1
$region0: #{tpu_custom_call.1}
  #allocation0 [shape = 'u32[]', space=smem, size = 0x4, offset = 0x4, fixed_abs, tag = 'smem constant byte address 0x4 - core index']
  #allocation1 [shape = 'u32[144,128]{1,0:T(1,128)}', space=vmem, size = 0x12000, scoped, tag = 'internal scratch']
  %s0 = inlined_call_operand.vmem [shape: f32[16,20], index: 0, kind: input, shape index: {}]
  %s1 = inlined_call_operand.vmem [shape: f32[20,256], index: 1, kind: input, shape index: {}]
  %s2 = inlined_call_operand.vmem [shape: f32[1,256], index: 2, kind: input, shape index: {}]
  %s3 = inlined_call_operand.vmem [shape: f32[256,10], index: 3, kind: input, shape index: {}]
  %s4 = inlined_call_operand.vmem [shape: f32[1,10], index: 4, kind: input, shape index: {}]
  %s5 = inlined_call_operand.hbm [shape: f32[16,10], index: 5, kind: output, shape index: {}]
  %s6 = sld [smem:[#allocation0]]
  $region30: #{tpu_custom_call.1} parent=0
    _
  %s8 = ssub.s32 1, %s6
  %s9 = scalar_select 0, %s8, %s6
  $region1: #{tpu_custom_call.1} parent=0
    #allocation2 [shape = 'u8[8192]{0}', space=vmem, size = 0x2000, scoped, tag = 'output window, operand 0, single buffered']
    #allocation3 [shape = 's32[1]{0}', space=sflag, size = 0x4, scoped, tag = 'scoped memory for tpu_custom_call.1']
    %10 = vsyncpa [#allocation3], 0
    // Predicated region
    $region2: #{tpu_custom_call.1} parent=1 // pred_check
      _
    $region3: #{tpu_custom_call.1} parent=1 // pred_check_branch
      %12 = sbr.rel (0) target = $region5
    $region4: #{tpu_custom_call.1} parent=1 // pred_region
      _
    $region5: #{tpu_custom_call.1} parent=1 // pred_fallthru
      _
    // Predicated region
    $region6: #{tpu_custom_call.1} parent=1 // pred_check
      _
    $region7: #{tpu_custom_call.1} parent=1 // pred_check_branch
      %14 = sbr.rel (0) target = $region9
    $region8: #{tpu_custom_call.1} parent=1 // pred_region
      _
    $region9: #{tpu_custom_call.1} parent=1 // pred_fallthru
      _
    // Predicated region
    $region10: #{tpu_custom_call.1} parent=1 // pred_check
      _
    $region11: #{tpu_custom_call.1} parent=1 // pred_check_branch
      %16 = sbr.rel (0) target = $region13
    $region12: #{tpu_custom_call.1} parent=1 // pred_region
      _
    $region13: #{tpu_custom_call.1} parent=1 // pred_fallthru
      _
    // Predicated region
    $region14: #{tpu_custom_call.1} parent=1 // pred_check
      _
    $region15: #{tpu_custom_call.1} parent=1 // pred_check_branch
      %18 = sbr.rel (0) target = $region17
    $region16: #{tpu_custom_call.1} parent=1 // pred_region
      _
    $region17: #{tpu_custom_call.1} parent=1 // pred_fallthru
      _
    // Predicated region
    $region18: #{tpu_custom_call.1} parent=1 // pred_check
      _
    $region19: #{tpu_custom_call.1} parent=1 // pred_check_branch
      %20 = sbr.rel (0) target = $region21
    $region20: #{tpu_custom_call.1} parent=1 // pred_region
      _
    $region21: #{tpu_custom_call.1} parent=1 // pred_fallthru
      _
    %v21 = vld [vmem:[%s0] sm:$0xff]
    %v22 = vld [vmem:[%s0 + $0x8] sm:$0xff]
    %v23 = vld [vmem:[%s1] sm:$0xff]
    %v24 = vld [vmem:[%s1 + $0x8] sm:$0xff]
    %v25 = vld [vmem:[%s1 + $0x10] sm:$0xff]
    %v26 = vld [vmem:[%s1 + $0x18] sm:$0xff]
    %v27 = vld [vmem:[%s1 + $0x20] sm:$0xf]
    %v28 = vld [vmem:[%s1 + $0x28] sm:$0xf]
    %v29 = vld [vmem:[%s2] sm:$0x3]
    %v31 = vlaneseq
    %v32 = vshrl.u32 %v31, 7
    %v33 = vsub.s32 0, %v32
    %v34 = vrot.slane %v29, %v33
    %v35 = vlaneseq
    %v36 = vshrl.u32 %v35, 7
    %v37 = vsub.s32 1, %v36
    %v38 = vrot.slane %v29, %v37
    %vm41 = vcmask 162816
    %v43 = vsel %vm41, %v21, 0
    %v46 = vsel %vm41, %v22, 0
    %vm48 = vcmask 1043456
    %v50 = vsel %vm48, %v27, 0
    %v53 = vsel %vm48, %v28, 0
    %55 = vmatprep.subr.mxu0 0.0
    %56 = vmatpush1.msra.mxu0 0.0
    %57 = vmatprep.subr.mxu0 0.0
    %58 = vmatpush1.msra.mxu0 0.0
    %59 = vmatprep.subr.mxu0 0.0
    %60 = vmatpush1.msra.mxu0 0.0
    %61 = vmatprep.subr.mxu0 0.0
    %62 = vmatpush1.msra.mxu0 0.0
    %63 = vmatprep.subr.mxu0 0.0
    %64 = vmatpush1.msra.mxu0 0.0
    %65 = vmatprep.subr.mxu0 0.0
    %66 = vmatpush1.msra.mxu0 0.0
    %67 = vmatprep.subr.mxu0 0.0
    %68 = vmatpush1.msra.mxu0 0.0
    %69 = vmatprep.subr.mxu0 0.0
    %70 = vmatpush1.msra.mxu0 0.0
    %71 = vmatprep.subr.mxu0 0.0
    %72 = vmatpush1.msra.mxu0 0.0
    %73 = vmatprep.subr.mxu0 0.0
    %74 = vmatpush1.msra.mxu0 0.0
    %75 = vmatprep.subr.mxu0 0.0
    %76 = vmatpush1.msra.mxu0 0.0
    %77 = vmatprep.subr.mxu0 0.0
    %78 = vmatpush1.msra.mxu0 0.0
    %79 = vmatprep.subr.mxu0 0.0
    %80 = vmatpush1.msra.mxu0 0.0
    %81 = vmatprep.subr.mxu0 %v53
    %82 = vmatpush1.msra.mxu0 %v50
    %83 = vmatprep.subr.mxu0 %v26
    %84 = vmatpush1.msra.mxu0 %v25
    %85 = vmatprep.subr.mxu0 %v24
    %86 = vmatpush1.msra.mxu0 %v23
    %87 = vmatprep.subr.mxu0 0.0
    %88 = vmatpush2.msra.mxu0 0.0
    %89 = vmatprep.subr.mxu0 0.0
    %90 = vmatpush2.msra.mxu0 0.0
    %91 = vmatprep.subr.mxu0 0.0
    %92 = vmatpush2.msra.mxu0 0.0
    %93 = vmatprep.subr.mxu0 0.0
    %94 = vmatpush2.msra.mxu0 0.0
    %95 = vmatprep.subr.mxu0 0.0
    %96 = vmatpush2.msra.mxu0 0.0
    %97 = vmatprep.subr.mxu0 0.0
    %98 = vmatpush2.msra.mxu0 0.0
    %99 = vmatprep.subr.mxu0 0.0
    %100 = vmatpush2.msra.mxu0 0.0
    %101 = vmatprep.subr.mxu0 0.0
    %102 = vmatpush2.msra.mxu0 0.0
    %103 = vmatprep.subr.mxu0 0.0
    %104 = vmatpush2.msra.mxu0 0.0
    %105 = vmatprep.subr.mxu0 0.0
    %106 = vmatpush2.msra.mxu0 0.0
    %107 = vmatprep.subr.mxu0 0.0
    %108 = vmatpush2.msra.mxu0 0.0
    %109 = vmatprep.subr.mxu0 0.0
    %110 = vmatpush2.msra.mxu0 0.0
    %111 = vmatprep.subr.mxu0 0.0
    %112 = vmatpush2.msra.mxu0 0.0
    %113 = vmatprep.subr.mxu0 0.0
    %114 = vmatpush2.msra.mxu0 0.0
    %115 = vmatprep.subr.mxu0 0.0
    %116 = vmatpush2.msra.mxu0 0.0
    %117 = vmatprep.subr.mxu0 0.0
    %118 = vmatpush2.msra.mxu0 0.0
    %119 = vmatprep.mubr.f32.mxu0 0.0
    %120 = vmatmul.mubr.f32.gmra.mxu0 %v43
    %v121 = vpop.f32.mrf.mxu0
    %v122 = vadd.f32 %v34, %v121
    %v123 = vpop.f32.mrf.mxu0
    %v124 = vadd.f32 %v38, %v123
    %125 = vmatprep.mubr.f32.mxu0 0.0
    %126 = vmatmul.mubr.f32.gmra.mxu0 %v46
    %v127 = vpop.f32.mrf.mxu0
    %v128 = vadd.f32 %v34, %v127
    %v129 = vpop.f32.mrf.mxu0
    %v130 = vadd.f32 %v38, %v129
    %131 = vdwg.mxu0
    %v132 = vmax.f32 %v122, 0.0
    %v133 = vmax.f32 %v124, 0.0
    %v134 = vmax.f32 %v128, 0.0
    %v135 = vmax.f32 %v130, 0.0
    %v136 = vld [vmem:[%s3] sm:$0xff]
    %v137 = vld [vmem:[%s3 + $0x8] sm:$0xff]
    %v138 = vld [vmem:[%s3 + $0x10] sm:$0xff]
    %v139 = vld [vmem:[%s3 + $0x18] sm:$0xff]
    %v140 = vld [vmem:[%s3 + $0x20] sm:$0xff]
    %v141 = vld [vmem:[%s3 + $0x28] sm:$0xff]
    %v142 = vld [vmem:[%s3 + $0x30] sm:$0xff]
    %v143 = vld [vmem:[%s3 + $0x38] sm:$0xff]
    %v144 = vld [vmem:[%s3 + $0x40] sm:$0xff]
    %v145 = vld [vmem:[%s3 + $0x48] sm:$0xff]
    %v146 = vld [vmem:[%s3 + $0x50] sm:$0xff]
    %v147 = vld [vmem:[%s3 + $0x58] sm:$0xff]
    %v148 = vld [vmem:[%s3 + $0x60] sm:$0xff]
    %v149 = vld [vmem:[%s3 + $0x68] sm:$0xff]
    %v150 = vld [vmem:[%s3 + $0x70] sm:$0xff]
    %v151 = vld [vmem:[%s3 + $0x78] sm:$0xff]
    %v152 = vld [vmem:[%s3 + $0x80] sm:$0xff]
    %v153 = vld [vmem:[%s3 + $0x88] sm:$0xff]
    %v154 = vld [vmem:[%s3 + $0x90] sm:$0xff]
    %v155 = vld [vmem:[%s3 + $0x98] sm:$0xff]
    %v156 = vld [vmem:[%s3 + $0xa0] sm:$0xff]
    %v157 = vld [vmem:[%s3 + $0xa8] sm:$0xff]
    %v158 = vld [vmem:[%s3 + $0xb0] sm:$0xff]
    %v159 = vld [vmem:[%s3 + $0xb8] sm:$0xff]
    %v160 = vld [vmem:[%s3 + $0xc0] sm:$0xff]
    %v161 = vld [vmem:[%s3 + $0xc8] sm:$0xff]
    %v162 = vld [vmem:[%s3 + $0xd0] sm:$0xff]
    %v163 = vld [vmem:[%s3 + $0xd8] sm:$0xff]
    %v164 = vld [vmem:[%s3 + $0xe0] sm:$0xff]
    %v165 = vld [vmem:[%s3 + $0xe8] sm:$0xff]
    %v166 = vld [vmem:[%s3 + $0xf0] sm:$0xff]
    %v167 = vld [vmem:[%s3 + $0xf8] sm:$0xff]
    %v168 = vld [vmem:[%s4] sm:$0x1]
    %v170 = vlaneseq
    %v171 = vshrl.u32 %v170, 7
    %v172 = vsub.s32 0, %v171
    %v173 = vrot.slane %v168, %v172
    %175 = vmatprep.subr.mxu0 0.0
    %176 = vmatpush1.msra.mxu0 %v151
    %177 = vmatprep.subr.mxu0 0.0
    %178 = vmatpush1.msra.mxu0 %v150
    %179 = vmatprep.subr.mxu0 0.0
    %180 = vmatpush1.msra.mxu0 %v149
    %181 = vmatprep.subr.mxu0 0.0
    %182 = vmatpush1.msra.mxu0 %v148
    %183 = vmatprep.subr.mxu0 0.0
    %184 = vmatpush1.msra.mxu0 %v147
    %185 = vmatprep.subr.mxu0 0.0
    %186 = vmatpush1.msra.mxu0 %v146
    %187 = vmatprep.subr.mxu0 0.0
    %188 = vmatpush1.msra.mxu0 %v145
    %189 = vmatprep.subr.mxu0 0.0
    %190 = vmatpush1.msra.mxu0 %v144
    %191 = vmatprep.subr.mxu0 0.0
    %192 = vmatpush1.msra.mxu0 %v143
    %193 = vmatprep.subr.mxu0 0.0
    %194 = vmatpush1.msra.mxu0 %v142
    %195 = vmatprep.subr.mxu0 0.0
    %196 = vmatpush1.msra.mxu0 %v141
    %197 = vmatprep.subr.mxu0 0.0
    %198 = vmatpush1.msra.mxu0 %v140
    %199 = vmatprep.subr.mxu0 0.0
    %200 = vmatpush1.msra.mxu0 %v139
    %201 = vmatprep.subr.mxu0 0.0
    %202 = vmatpush1.msra.mxu0 %v138
    %203 = vmatprep.subr.mxu0 0.0
    %204 = vmatpush1.msra.mxu0 %v137
    %205 = vmatprep.subr.mxu0 0.0
    %206 = vmatpush1.msra.mxu0 %v136
    %207 = vmatprep.subr.mxu0 0.0
    %208 = vmatpush2.msra.mxu0 %v167
    %209 = vmatprep.subr.mxu0 0.0
    %210 = vmatpush2.msra.mxu0 %v166
    %211 = vmatprep.subr.mxu0 0.0
    %212 = vmatpush2.msra.mxu0 %v165
    %213 = vmatprep.subr.mxu0 0.0
    %214 = vmatpush2.msra.mxu0 %v164
    %215 = vmatprep.subr.mxu0 0.0
    %216 = vmatpush2.msra.mxu0 %v163
    %217 = vmatprep.subr.mxu0 0.0
    %218 = vmatpush2.msra.mxu0 %v162
    %219 = vmatprep.subr.mxu0 0.0
    %220 = vmatpush2.msra.mxu0 %v161
    %221 = vmatprep.subr.mxu0 0.0
    %222 = vmatpush2.msra.mxu0 %v160
    %223 = vmatprep.subr.mxu0 0.0
    %224 = vmatpush2.msra.mxu0 %v159
    %225 = vmatprep.subr.mxu0 0.0
    %226 = vmatpush2.msra.mxu0 %v158
    %227 = vmatprep.subr.mxu0 0.0
    %228 = vmatpush2.msra.mxu0 %v157
    %229 = vmatprep.subr.mxu0 0.0
    %230 = vmatpush2.msra.mxu0 %v156
    %231 = vmatprep.subr.mxu0 0.0
    %232 = vmatpush2.msra.mxu0 %v155
    %233 = vmatprep.subr.mxu0 0.0
    %234 = vmatpush2.msra.mxu0 %v154
    %235 = vmatprep.subr.mxu0 0.0
    %236 = vmatpush2.msra.mxu0 %v153
    %237 = vmatprep.subr.mxu0 0.0
    %238 = vmatpush2.msra.mxu0 %v152
    %239 = vmatprep.mubr.f32.mxu0 %v133
    %240 = vmatmul.mubr.f32.gmra.mxu0 %v132
    %v241 = vpop.f32.mrf.mxu0
    %v242 = vadd.f32 %v173, %v241
    %v243 = vpop.f32.mrf.mxu0
    %244 = vmatprep.mubr.f32.mxu0 %v135
    %245 = vmatmul.mubr.f32.gmra.mxu0 %v134
    %v246 = vpop.f32.mrf.mxu0
    %v247 = vadd.f32 %v173, %v246
    %v248 = vpop.f32.mrf.mxu0
    %249 = vdwg.mxu0
    %vm250 = vcmask 80896
    %251 = vst.msk [vmem:[#allocation2] sm:$0xff] %vm250, %v242
    %252 = vst.msk [vmem:[#allocation2 + $0x8] sm:$0xff] %vm250, %v247
    // Predicated region
    $region22: #{tpu_custom_call.1} parent=1 // pred_check
      _
    $region23: #{tpu_custom_call.1} parent=1 // pred_check_branch
      %254 = sbr.rel (0) target = $region25
    $region24: #{tpu_custom_call.1} parent=1 // pred_region
      %s256 = ssub.s32 256, 256
      %257 = vsyncadd [#allocation3], %s256
      %s258 = sshll.u32 [#allocation2], 4
      %s259 = int_to_ptr.vmem [resolvable:$true] %s258
      %264 = dma.vmem_to_hbm [thread:$0]  %s259, 256, %s5, [#allocation3], 128, 128, 8
    $region25: #{tpu_custom_call.1} parent=1 // pred_fallthru
      _
    // Predicated region
    $region26: #{tpu_custom_call.1} parent=1 // pred_check
      _
    $region27: #{tpu_custom_call.1} parent=1 // pred_check_branch
      %266 = sbr.rel (0) target = $region29
    $region28: #{tpu_custom_call.1} parent=1 // pred_region
      %267 = dma.done [#allocation3], 256
    $region29: #{tpu_custom_call.1} parent=1 // pred_fallthru
      _
    %268 = vsyncpa [#allocation3], 1

</llo_original>
